<compile_context>
chip_gen: v6e
topology: v6e:2x2x1
jax: 0.10.0
libtpu: 0.0.40
codegen_flags: <defaults>
</compile_context>

<pallas_src>
import functools

import jax
import jax.numpy as jnp
from jax.experimental import pallas as pl
from jax.experimental.pallas import tpu as pltpu


# ---------------------------------------------------------------------------
# Fused SMNN forward kernel
# ---------------------------------------------------------------------------
def _smnn_kernel(*refs, exp_sizes, conf_sizes, relu_sizes, max_value):
    n_layers = len(exp_sizes)
    x_mono_ref, x_nm_ref = refs[0], refs[1]
    layer_refs = []
    p = 2
    for _ in range(n_layers):
        layer_refs.append(refs[p:p + 6])      # (ew, eb, cw, cb, rw, rb)
        p += 6
    fcw_ref, fcb_ref = refs[p], refs[p + 1]
    o_ref = refs[p + 2]

    def affine(x, w, b):
        return jnp.dot(x, w, preferred_element_type=jnp.float32) + b

    def leaky_clip(z, hi):
        # (1 - 0.01) * clip(z, 0, hi) + 0.01 * z
        return (1.0 - 0.01) * jnp.clip(z, 0.0, hi) + 0.01 * z

    x_mono = x_mono_ref[...]
    x_nm = x_nm_ref[...]

    e = c = r = None
    for i in range(n_layers):
        ew_ref, eb_ref, cw_ref, cb_ref, rw_ref, rb_ref = layer_refs[i]
        ew = jnp.exp(ew_ref[...])
        eb = eb_ref[...]
        if i == 0:
            e_pre = affine(x_mono, ew, eb)
            c_pre = affine(x_nm, cw_ref[...], cb_ref[...])
            r_pre = affine(x_nm, rw_ref[...], rb_ref[...])
        else:
            # ExpUnit input is cat([e, c], 1) -> split the weight rows instead.
            ne = exp_sizes[i - 1]
            e_pre = (jnp.dot(e, ew[:ne, :], preferred_element_type=jnp.float32)
                     + jnp.dot(c, ew[ne:, :], preferred_element_type=jnp.float32)
                     + eb)
            # conf uses the PREVIOUS relu output, then relu updates itself.
            c_pre = affine(r, cw_ref[...], cb_ref[...])
            r_pre = affine(r, rw_ref[...], rb_ref[...])
        e = leaky_clip(e_pre, max_value)   # ExpUnit activation
        c = leaky_clip(c_pre, 1.0)         # ConfluenceUnit activation
        r = jnp.maximum(r_pre, 0.0)        # ReLUUnit

    # FC head: input is cat([e, c, r], 1) with exp-constrained weights.
    fcw = jnp.exp(fcw_ref[...])
    ne, nc = exp_sizes[-1], conf_sizes[-1]
    out = (jnp.dot(e, fcw[:ne, :], preferred_element_type=jnp.float32)
           + jnp.dot(c, fcw[ne:ne + nc, :], preferred_element_type=jnp.float32)
           + jnp.dot(r, fcw[ne + nc:, :], preferred_element_type=jnp.float32)
           + fcb_ref[...])
    o_ref[...] = out.astype(o_ref.dtype)


def smnn_forward(x, params, mono_feature, *, max_value=1.0, tile_m=512):
    """Fused SMNN forward. params = {'layers': [(ew, eb, cw, cb, rw, rb), ...],
    'fc': (fc_w, fc_b)} with weights shaped (in_features, out_features)."""
    M, input_size = x.shape
    mono_idx = list(mono_feature)
    non_mono_idx = sorted(set(range(input_size)) - set(mono_idx))

    # Static column gather (mono / non-mono split) stays in the JAX wrapper.
    x_mono = x[:, jnp.array(mono_idx)]
    x_nm = x[:, jnp.array(non_mono_idx)]

    layers = params["layers"]
    fc_w, fc_b = params["fc"]
    exp_sizes = tuple(int(l[0].shape[1]) for l in layers)
    conf_sizes = tuple(int(l[2].shape[1]) for l in layers)
    relu_sizes = tuple(int(l[4].shape[1]) for l in layers)

    # Batch tiling: one block for small batch, 512-row tiles otherwise.
    tm = M if (M <= tile_m or M % tile_m != 0) else tile_m
    grid = (M // tm,)

    def _const_spec(a):
        return pl.BlockSpec(a.shape, lambda i: (0,) * a.ndim)

    flat = [x_mono, x_nm]
    in_specs = [
        pl.BlockSpec((tm, x_mono.shape[1]), lambda i: (i, 0)),
        pl.BlockSpec((tm, x_nm.shape[1]), lambda i: (i, 0)),
    ]
    for (ew, eb, cw, cb, rw, rb) in layers:
        for w, b in ((ew, eb), (cw, cb), (rw, rb)):
            b2 = b.reshape(1, -1)
            flat += [w, b2]
            in_specs += [_const_spec(w), _const_spec(b2)]
    fcb2 = fc_b.reshape(1, -1)
    flat += [fc_w, fcb2]
    in_specs += [_const_spec(fc_w), _const_spec(fcb2)]

    out_dim = fc_w.shape[1]
    kernel = functools.partial(
        _smnn_kernel, exp_sizes=exp_sizes, conf_sizes=conf_sizes,
        relu_sizes=relu_sizes, max_value=float(max_value))

    return pl.pallas_call(
        kernel,
        out_shape=jax.ShapeDtypeStruct((M, out_dim), x.dtype),
        grid=grid,
        in_specs=in_specs,
        out_specs=pl.BlockSpec((tm, out_dim), lambda i: (i, 0)),
        compiler_params=pltpu.CompilerParams(
            dimension_semantics=("parallel",)),
    )(*flat)


# ---------------------------------------------------------------------------
# Parameter construction (mirrors the PyTorch inits)
# ---------------------------------------------------------------------------
def _xavier_uniform(key, fan_in, fan_out, dtype=jnp.float32):
    limit = (6.0 / (fan_in + fan_out)) ** 0.5
    return jax.random.uniform(key, (fan_in, fan_out), dtype,
                              minval=-limit, maxval=limit)


def _trunc_normal_bias(key, n, std=0.5, dtype=jnp.float32):
    return std * jax.random.truncated_normal(key, -2.0, 2.0, (n,), dtype)


def make_smnn_params(key, input_size, mono_size, exp_unit_size,
                     relu_unit_size, conf_unit_size, dtype=jnp.float32):
    assert len(exp_unit_size) == len(relu_unit_size) == len(conf_unit_size)
    non_mono_size = input_size - mono_size
    layers = []
    for i in range(len(exp_unit_size)):
        key, k1, k2, k3, k4, k5 = jax.random.split(key, 6)
        exp_in = mono_size if i == 0 else exp_unit_size[i - 1] + conf_unit_size[i - 1]
        cr_in = non_mono_size if i == 0 else relu_unit_size[i - 1]
        # ExpUnit: W ~ U(-3, 0), b = 0
        ew = jax.random.uniform(k1, (exp_in, exp_unit_size[i]), dtype,
                                minval=-3.0, maxval=0.0)
        eb = jnp.zeros((exp_unit_size[i],), dtype)
        # ConfluenceUnit: xavier W, truncated-normal(std=0.5) b
        cw = _xavier_uniform(k2, cr_in, conf_unit_size[i], dtype)
        cb = _trunc_normal_bias(k3, conf_unit_size[i], dtype=dtype)
        # ReLUUnit: xavier W, truncated-normal(std=0.5) b
        rw = _xavier_uniform(k4, cr_in, relu_unit_size[i], dtype)
        rb = _trunc_normal_bias(k5, relu_unit_size[i], dtype=dtype)
        layers.append((ew, eb, cw, cb, rw, rb))
    key, kf = jax.random.split(key)
    fc_in = exp_unit_size[-1] + conf_unit_size[-1] + relu_unit_size[-1]
    fcw = jax.random.uniform(kf, (fc_in, 1), dtype, minval=-3.0, maxval=0.0)
    fcb = jnp.zeros((1,), dtype)
    return {"layers": layers, "fc": (fcw, fcb)}


# ---------------------------------------------------------------------------
# Pure-JAX reference (direct transcription of the PyTorch forward)
# ---------------------------------------------------------------------------
def smnn_ref(x, params, mono_feature, *, max_value=1.0):
    input_size = x.shape[1]
    mono_idx = jnp.array(list(mono_feature))
    non_mono_idx = jnp.array(sorted(set(range(input_size)) - set(mono_feature)))
    xm, xn = x[:, mono_idx], x[:, non_mono_idx]

    def exp_unit(z, w, b):
        out = z @ jnp.exp(w) + b
        return (1.0 - 0.01) * jnp.clip(out, 0.0, max_value) + 0.01 * out

    def conf_unit(z, w, b):
        out = z @ w + b
        return (1.0 - 0.01) * jnp.clip(out, 0.0, 1.0) + 0.01 * out

    def relu_unit(z, w, b):
        return jnp.maximum(z @ w + b, 0.0)

    ec = r = None
    for i, (ew, eb, cw, cb, rw, rb) in enumerate(params["layers"]):
        if i == 0:
            e = exp_unit(xm, ew, eb)
            c = conf_unit(xn, cw, cb)
            r = relu_unit(xn, rw, rb)
        else:
            e = exp_unit(ec, ew, eb)
            c = conf_unit(r, cw, cb)
            r = relu_unit(r, rw, rb)
        ec = jnp.concatenate([e, c], axis=1)
    fcw, fcb = params["fc"]
    return jnp.concatenate([ec, r], axis=1) @ jnp.exp(fcw) + fcb


# ---------------------------------------------------------------------------
# Main
# ---------------------------------------------------------------------------
if __name__ == "__main__":
    key = jax.random.PRNGKey(0)

    batch = 8
    input_size = 16
    mono_size = 6
    mono_feature = (0, 2, 4, 6, 8, 10)
    exp_unit_size = (32, 32)
    relu_unit_size = (32, 32)
    conf_unit_size = (16, 16)

    key, kx, kp = jax.random.split(key, 3)
    x = jax.random.normal(kx, (batch, input_size), jnp.float32)
    params = make_smnn_params(kp, input_size, mono_size, exp_unit_size,
                              relu_unit_size, conf_unit_size)

    out = smnn_forward(x, params, mono_feature)
    out = jax.block_until_ready(out)

    ref = smnn_ref(x, params, mono_feature)
    assert out.shape == (batch, 1), out.shape
    assert jnp.allclose(out, ref, atol=1e-4, rtol=1e-4), \
        float(jnp.max(jnp.abs(out - ref)))

    print("KERNEL_OK")
</pallas_src>

<mosaic_0001>
module attributes {stable_mosaic.version = 11 : i64} {
  func.func @_smnn_kernel(%arg0: i32, %arg1: memref<8x6xf32, #tpu.memory_space<vmem>>, %arg2: memref<8x10xf32, #tpu.memory_space<vmem>>, %arg3: memref<6x32xf32, #tpu.memory_space<vmem>>, %arg4: memref<1x32xf32, #tpu.memory_space<vmem>>, %arg5: memref<10x16xf32, #tpu.memory_space<vmem>>, %arg6: memref<1x16xf32, #tpu.memory_space<vmem>>, %arg7: memref<10x32xf32, #tpu.memory_space<vmem>>, %arg8: memref<1x32xf32, #tpu.memory_space<vmem>>, %arg9: memref<48x32xf32, #tpu.memory_space<vmem>>, %arg10: memref<1x32xf32, #tpu.memory_space<vmem>>, %arg11: memref<32x16xf32, #tpu.memory_space<vmem>>, %arg12: memref<1x16xf32, #tpu.memory_space<vmem>>, %arg13: memref<32x32xf32, #tpu.memory_space<vmem>>, %arg14: memref<1x32xf32, #tpu.memory_space<vmem>>, %arg15: memref<80x1xf32, #tpu.memory_space<vmem>>, %arg16: memref<1x1xf32, #tpu.memory_space<vmem>>, %arg17: memref<8x1xf32, #tpu.memory_space<vmem>>) attributes {dimension_semantics = [#tpu.dimension_semantics<parallel>], iteration_bounds = array<i64: 1>, scalar_prefetch = 0 : i64, scratch_operands = 0 : i64, tpu.core_type = #tpu.core_type<tc>, window_params = [{transform_indices = @transform_0, window_bounds = array<i64: 8, 6>}, {transform_indices = @transform_1, window_bounds = array<i64: 8, 10>}, {pipeline_mode = #tpu.pipeline_mode<synchronous>, transform_indices = @transform_2, window_bounds = array<i64: 6, 32>}, {pipeline_mode = #tpu.pipeline_mode<synchronous>, transform_indices = @transform_3, window_bounds = array<i64: 1, 32>}, {pipeline_mode = #tpu.pipeline_mode<synchronous>, transform_indices = @transform_4, window_bounds = array<i64: 10, 16>}, {pipeline_mode = #tpu.pipeline_mode<synchronous>, transform_indices = @transform_5, window_bounds = array<i64: 1, 16>}, {pipeline_mode = #tpu.pipeline_mode<synchronous>, transform_indices = @transform_6, window_bounds = array<i64: 10, 32>}, {pipeline_mode = #tpu.pipeline_mode<synchronous>, transform_indices = @transform_7, window_bounds = array<i64: 1, 32>}, {pipeline_mode = #tpu.pipeline_mode<synchronous>, transform_indices = @transform_8, window_bounds = array<i64: 48, 32>}, {pipeline_mode = #tpu.pipeline_mode<synchronous>, transform_indices = @transform_9, window_bounds = array<i64: 1, 32>}, {pipeline_mode = #tpu.pipeline_mode<synchronous>, transform_indices = @transform_10, window_bounds = array<i64: 32, 16>}, {pipeline_mode = #tpu.pipeline_mode<synchronous>, transform_indices = @transform_11, window_bounds = array<i64: 1, 16>}, {pipeline_mode = #tpu.pipeline_mode<synchronous>, transform_indices = @transform_12, window_bounds = array<i64: 32, 32>}, {pipeline_mode = #tpu.pipeline_mode<synchronous>, transform_indices = @transform_13, window_bounds = array<i64: 1, 32>}, {pipeline_mode = #tpu.pipeline_mode<synchronous>, transform_indices = @transform_14, window_bounds = array<i64: 80, 1>}, {pipeline_mode = #tpu.pipeline_mode<synchronous>, transform_indices = @transform_15, window_bounds = array<i64: 1, 1>}, {transform_indices = @transform_16, window_bounds = array<i64: 8, 1>}]} {
    %c0 = arith.constant 0 : index
    %c0_0 = arith.constant 0 : index
    %0 = vector.load %arg1[%c0, %c0_0] : memref<8x6xf32, #tpu.memory_space<vmem>>, vector<8x6xf32>
    %c0_1 = arith.constant 0 : index
    %c0_2 = arith.constant 0 : index
    %1 = vector.load %arg2[%c0_1, %c0_2] : memref<8x10xf32, #tpu.memory_space<vmem>>, vector<8x10xf32>
    %c0_3 = arith.constant 0 : index
    %c0_4 = arith.constant 0 : index
    %2 = vector.load %arg3[%c0_3, %c0_4] : memref<6x32xf32, #tpu.memory_space<vmem>>, vector<6x32xf32>
    %3 = math.exp %2 : vector<6x32xf32>
    %c0_5 = arith.constant 0 : index
    %c0_6 = arith.constant 0 : index
    %4 = vector.load %arg4[%c0_5, %c0_6] : memref<1x32xf32, #tpu.memory_space<vmem>>, vector<1x32xf32>
    %cst = arith.constant dense<0.000000e+00> : vector<8x32xf32>
    %5 = tpu.matmul %0, %3, %cst {dimension_numbers = #tpu.dot_dimension_numbers<[1], [0], [0], [1], [0, 0, 1, 1], [], []>} : vector<8x6xf32>, vector<6x32xf32>, vector<8x32xf32> -> vector<8x32xf32>
    %6 = vector.broadcast %4 : vector<1x32xf32> to vector<8x32xf32>
    %7 = arith.addf %5, %6 : vector<8x32xf32>
    %c0_7 = arith.constant 0 : index
    %c0_8 = arith.constant 0 : index
    %8 = vector.load %arg5[%c0_7, %c0_8] : memref<10x16xf32, #tpu.memory_space<vmem>>, vector<10x16xf32>
    %c0_9 = arith.constant 0 : index
    %c0_10 = arith.constant 0 : index
    %9 = vector.load %arg6[%c0_9, %c0_10] : memref<1x16xf32, #tpu.memory_space<vmem>>, vector<1x16xf32>
    %cst_11 = arith.constant dense<0.000000e+00> : vector<8x16xf32>
    %10 = tpu.matmul %1, %8, %cst_11 {dimension_numbers = #tpu.dot_dimension_numbers<[1], [0], [0], [1], [0, 0, 1, 1], [], []>} : vector<8x10xf32>, vector<10x16xf32>, vector<8x16xf32> -> vector<8x16xf32>
    %11 = vector.broadcast %9 : vector<1x16xf32> to vector<8x16xf32>
    %12 = arith.addf %10, %11 : vector<8x16xf32>
    %c0_12 = arith.constant 0 : index
    %c0_13 = arith.constant 0 : index
    %13 = vector.load %arg7[%c0_12, %c0_13] : memref<10x32xf32, #tpu.memory_space<vmem>>, vector<10x32xf32>
    %c0_14 = arith.constant 0 : index
    %c0_15 = arith.constant 0 : index
    %14 = vector.load %arg8[%c0_14, %c0_15] : memref<1x32xf32, #tpu.memory_space<vmem>>, vector<1x32xf32>
    %cst_16 = arith.constant dense<0.000000e+00> : vector<8x32xf32>
    %15 = tpu.matmul %1, %13, %cst_16 {dimension_numbers = #tpu.dot_dimension_numbers<[1], [0], [0], [1], [0, 0, 1, 1], [], []>} : vector<8x10xf32>, vector<10x32xf32>, vector<8x32xf32> -> vector<8x32xf32>
    %16 = vector.broadcast %14 : vector<1x32xf32> to vector<8x32xf32>
    %17 = arith.addf %15, %16 : vector<8x32xf32>
    %cst_17 = arith.constant 0.000000e+00 : f32
    %cst_18 = arith.constant 1.000000e+00 : f32
    %18 = vector.broadcast %cst_17 : f32 to vector<8x32xf32>
    %19 = arith.maximumf %18, %7 : vector<8x32xf32>
    %20 = vector.broadcast %cst_18 : f32 to vector<8x32xf32>
    %21 = arith.minimumf %20, %19 : vector<8x32xf32>
    %cst_19 = arith.constant 9.900000e-01 : f32
    %22 = vector.broadcast %cst_19 : f32 to vector<8x32xf32>
    %23 = arith.mulf %22, %21 : vector<8x32xf32>
    %cst_20 = arith.constant 0.00999999977 : f32
    %24 = vector.broadcast %cst_20 : f32 to vector<8x32xf32>
    %25 = arith.mulf %24, %7 : vector<8x32xf32>
    %26 = arith.addf %23, %25 : vector<8x32xf32>
    %cst_21 = arith.constant 0.000000e+00 : f32
    %cst_22 = arith.constant 1.000000e+00 : f32
    %27 = vector.broadcast %cst_21 : f32 to vector<8x16xf32>
    %28 = arith.maximumf %27, %12 : vector<8x16xf32>
    %29 = vector.broadcast %cst_22 : f32 to vector<8x16xf32>
    %30 = arith.minimumf %29, %28 : vector<8x16xf32>
    %cst_23 = arith.constant 9.900000e-01 : f32
    %31 = vector.broadcast %cst_23 : f32 to vector<8x16xf32>
    %32 = arith.mulf %31, %30 : vector<8x16xf32>
    %cst_24 = arith.constant 0.00999999977 : f32
    %33 = vector.broadcast %cst_24 : f32 to vector<8x16xf32>
    %34 = arith.mulf %33, %12 : vector<8x16xf32>
    %35 = arith.addf %32, %34 : vector<8x16xf32>
    %cst_25 = arith.constant 0.000000e+00 : f32
    %36 = vector.broadcast %cst_25 : f32 to vector<8x32xf32>
    %37 = arith.maximumf %17, %36 : vector<8x32xf32>
    %c0_26 = arith.constant 0 : index
    %c0_27 = arith.constant 0 : index
    %38 = vector.load %arg9[%c0_26, %c0_27] : memref<48x32xf32, #tpu.memory_space<vmem>>, vector<48x32xf32>
    %39 = math.exp %38 : vector<48x32xf32>
    %c0_28 = arith.constant 0 : index
    %c0_29 = arith.constant 0 : index
    %40 = vector.load %arg10[%c0_28, %c0_29] : memref<1x32xf32, #tpu.memory_space<vmem>>, vector<1x32xf32>
    %41 = vector.extract_strided_slice %39 {offsets = [0, 0], sizes = [32, 32], strides = [1, 1]} : vector<48x32xf32> to vector<32x32xf32>
    %cst_30 = arith.constant dense<0.000000e+00> : vector<8x32xf32>
    %42 = tpu.matmul %26, %41, %cst_30 {dimension_numbers = #tpu.dot_dimension_numbers<[1], [0], [0], [1], [0, 0, 1, 1], [], []>} : vector<8x32xf32>, vector<32x32xf32>, vector<8x32xf32> -> vector<8x32xf32>
    %43 = vector.extract_strided_slice %39 {offsets = [32, 0], sizes = [16, 32], strides = [1, 1]} : vector<48x32xf32> to vector<16x32xf32>
    %cst_31 = arith.constant dense<0.000000e+00> : vector<8x32xf32>
    %44 = tpu.matmul %35, %43, %cst_31 {dimension_numbers = #tpu.dot_dimension_numbers<[1], [0], [0], [1], [0, 0, 1, 1], [], []>} : vector<8x16xf32>, vector<16x32xf32>, vector<8x32xf32> -> vector<8x32xf32>
    %45 = arith.addf %42, %44 : vector<8x32xf32>
    %46 = vector.broadcast %40 : vector<1x32xf32> to vector<8x32xf32>
    %47 = arith.addf %45, %46 : vector<8x32xf32>
    %c0_32 = arith.constant 0 : index
    %c0_33 = arith.constant 0 : index
    %48 = vector.load %arg11[%c0_32, %c0_33] : memref<32x16xf32, #tpu.memory_space<vmem>>, vector<32x16xf32>
    %c0_34 = arith.constant 0 : index
    %c0_35 = arith.constant 0 : index
    %49 = vector.load %arg12[%c0_34, %c0_35] : memref<1x16xf32, #tpu.memory_space<vmem>>, vector<1x16xf32>
    %cst_36 = arith.constant dense<0.000000e+00> : vector<8x16xf32>
    %50 = tpu.matmul %37, %48, %cst_36 {dimension_numbers = #tpu.dot_dimension_numbers<[1], [0], [0], [1], [0, 0, 1, 1], [], []>} : vector<8x32xf32>, vector<32x16xf32>, vector<8x16xf32> -> vector<8x16xf32>
    %51 = vector.broadcast %49 : vector<1x16xf32> to vector<8x16xf32>
    %52 = arith.addf %50, %51 : vector<8x16xf32>
    %c0_37 = arith.constant 0 : index
    %c0_38 = arith.constant 0 : index
    %53 = vector.load %arg13[%c0_37, %c0_38] : memref<32x32xf32, #tpu.memory_space<vmem>>, vector<32x32xf32>
    %c0_39 = arith.constant 0 : index
    %c0_40 = arith.constant 0 : index
    %54 = vector.load %arg14[%c0_39, %c0_40] : memref<1x32xf32, #tpu.memory_space<vmem>>, vector<1x32xf32>
    %cst_41 = arith.constant dense<0.000000e+00> : vector<8x32xf32>
    %55 = tpu.matmul %37, %53, %cst_41 {dimension_numbers = #tpu.dot_dimension_numbers<[1], [0], [0], [1], [0, 0, 1, 1], [], []>} : vector<8x32xf32>, vector<32x32xf32>, vector<8x32xf32> -> vector<8x32xf32>
    %56 = vector.broadcast %54 : vector<1x32xf32> to vector<8x32xf32>
    %57 = arith.addf %55, %56 : vector<8x32xf32>
    %cst_42 = arith.constant 0.000000e+00 : f32
    %cst_43 = arith.constant 1.000000e+00 : f32
    %58 = vector.broadcast %cst_42 : f32 to vector<8x32xf32>
    %59 = arith.maximumf %58, %47 : vector<8x32xf32>
    %60 = vector.broadcast %cst_43 : f32 to vector<8x32xf32>
    %61 = arith.minimumf %60, %59 : vector<8x32xf32>
    %cst_44 = arith.constant 9.900000e-01 : f32
    %62 = vector.broadcast %cst_44 : f32 to vector<8x32xf32>
    %63 = arith.mulf %62, %61 : vector<8x32xf32>
    %cst_45 = arith.constant 0.00999999977 : f32
    %64 = vector.broadcast %cst_45 : f32 to vector<8x32xf32>
    %65 = arith.mulf %64, %47 : vector<8x32xf32>
    %66 = arith.addf %63, %65 : vector<8x32xf32>
    %cst_46 = arith.constant 0.000000e+00 : f32
    %cst_47 = arith.constant 1.000000e+00 : f32
    %67 = vector.broadcast %cst_46 : f32 to vector<8x16xf32>
    %68 = arith.maximumf %67, %52 : vector<8x16xf32>
    %69 = vector.broadcast %cst_47 : f32 to vector<8x16xf32>
    %70 = arith.minimumf %69, %68 : vector<8x16xf32>
    %cst_48 = arith.constant 9.900000e-01 : f32
    %71 = vector.broadcast %cst_48 : f32 to vector<8x16xf32>
    %72 = arith.mulf %71, %70 : vector<8x16xf32>
    %cst_49 = arith.constant 0.00999999977 : f32
    %73 = vector.broadcast %cst_49 : f32 to vector<8x16xf32>
    %74 = arith.mulf %73, %52 : vector<8x16xf32>
    %75 = arith.addf %72, %74 : vector<8x16xf32>
    %cst_50 = arith.constant 0.000000e+00 : f32
    %76 = vector.broadcast %cst_50 : f32 to vector<8x32xf32>
    %77 = arith.maximumf %57, %76 : vector<8x32xf32>
    %c0_51 = arith.constant 0 : index
    %c0_52 = arith.constant 0 : index
    %78 = vector.load %arg15[%c0_51, %c0_52] : memref<80x1xf32, #tpu.memory_space<vmem>>, vector<80x1xf32>
    %79 = math.exp %78 : vector<80x1xf32>
    %80 = vector.extract_strided_slice %79 {offsets = [0, 0], sizes = [32, 1], strides = [1, 1]} : vector<80x1xf32> to vector<32x1xf32>
    %cst_53 = arith.constant dense<0.000000e+00> : vector<8x1xf32>
    %81 = tpu.matmul %66, %80, %cst_53 {dimension_numbers = #tpu.dot_dimension_numbers<[1], [0], [0], [1], [0, 0, 1, 1], [], []>} : vector<8x32xf32>, vector<32x1xf32>, vector<8x1xf32> -> vector<8x1xf32>
    %82 = vector.extract_strided_slice %79 {offsets = [32, 0], sizes = [16, 1], strides = [1, 1]} : vector<80x1xf32> to vector<16x1xf32>
    %cst_54 = arith.constant dense<0.000000e+00> : vector<8x1xf32>
    %83 = tpu.matmul %75, %82, %cst_54 {dimension_numbers = #tpu.dot_dimension_numbers<[1], [0], [0], [1], [0, 0, 1, 1], [], []>} : vector<8x16xf32>, vector<16x1xf32>, vector<8x1xf32> -> vector<8x1xf32>
    %84 = arith.addf %81, %83 : vector<8x1xf32>
    %85 = vector.extract_strided_slice %79 {offsets = [48, 0], sizes = [32, 1], strides = [1, 1]} : vector<80x1xf32> to vector<32x1xf32>
    %cst_55 = arith.constant dense<0.000000e+00> : vector<8x1xf32>
    %86 = tpu.matmul %77, %85, %cst_55 {dimension_numbers = #tpu.dot_dimension_numbers<[1], [0], [0], [1], [0, 0, 1, 1], [], []>} : vector<8x32xf32>, vector<32x1xf32>, vector<8x1xf32> -> vector<8x1xf32>
    %87 = arith.addf %84, %86 : vector<8x1xf32>
    %c0_56 = arith.constant 0 : index
    %c0_57 = arith.constant 0 : index
    %88 = vector.load %arg16[%c0_56, %c0_57] : memref<1x1xf32, #tpu.memory_space<vmem>>, vector<1x1xf32>
    %89 = vector.broadcast %88 : vector<1x1xf32> to vector<8x1xf32>
    %90 = arith.addf %87, %89 : vector<8x1xf32>
    %c0_58 = arith.constant 0 : index
    %c0_59 = arith.constant 0 : index
    %91 = vector.load %arg17[%c0_58, %c0_59] : memref<8x1xf32, #tpu.memory_space<vmem>>, vector<8x1xf32>
    tpu.vector_store %arg17[%c0_58, %c0_59], %90 {strides = array<i32>} : memref<8x1xf32, #tpu.memory_space<vmem>>, vector<8x1xf32>,
    return
  }
  func.func @transform_0(%arg0: i32) -> (i32, i32) {
    %c0_i32 = arith.constant 0 : i32
    %c0_i32_0 = arith.constant 0 : i32
    return %arg0, %c0_i32 : i32, i32
  }
  func.func @transform_1(%arg0: i32) -> (i32, i32) {
    %c0_i32 = arith.constant 0 : i32
    %c0_i32_0 = arith.constant 0 : i32
    return %arg0, %c0_i32 : i32, i32
  }
  func.func @transform_2(%arg0: i32) -> (i32, i32) {
    %c0_i32 = arith.constant 0 : i32
    %c0_i32_0 = arith.constant 0 : i32
    %c0_i32_1 = arith.constant 0 : i32
    return %c0_i32, %c0_i32_0 : i32, i32
  }
  func.func @transform_3(%arg0: i32) -> (i32, i32) {
    %c0_i32 = arith.constant 0 : i32
    %c0_i32_0 = arith.constant 0 : i32
    %c0_i32_1 = arith.constant 0 : i32
    return %c0_i32, %c0_i32_0 : i32, i32
  }
  func.func @transform_4(%arg0: i32) -> (i32, i32) {
    %c0_i32 = arith.constant 0 : i32
    %c0_i32_0 = arith.constant 0 : i32
    %c0_i32_1 = arith.constant 0 : i32
    return %c0_i32, %c0_i32_0 : i32, i32
  }
  func.func @transform_5(%arg0: i32) -> (i32, i32) {
    %c0_i32 = arith.constant 0 : i32
    %c0_i32_0 = arith.constant 0 : i32
    %c0_i32_1 = arith.constant 0 : i32
    return %c0_i32, %c0_i32_0 : i32, i32
  }
  func.func @transform_6(%arg0: i32) -> (i32, i32) {
    %c0_i32 = arith.constant 0 : i32
    %c0_i32_0 = arith.constant 0 : i32
    %c0_i32_1 = arith.constant 0 : i32
    return %c0_i32, %c0_i32_0 : i32, i32
  }
  func.func @transform_7(%arg0: i32) -> (i32, i32) {
    %c0_i32 = arith.constant 0 : i32
    %c0_i32_0 = arith.constant 0 : i32
    %c0_i32_1 = arith.constant 0 : i32
    return %c0_i32, %c0_i32_0 : i32, i32
  }
  func.func @transform_8(%arg0: i32) -> (i32, i32) {
    %c0_i32 = arith.constant 0 : i32
    %c0_i32_0 = arith.constant 0 : i32
    %c0_i32_1 = arith.constant 0 : i32
    return %c0_i32, %c0_i32_0 : i32, i32
  }
  func.func @transform_9(%arg0: i32) -> (i32, i32) {
    %c0_i32 = arith.constant 0 : i32
    %c0_i32_0 = arith.constant 0 : i32
    %c0_i32_1 = arith.constant 0 : i32
    return %c0_i32, %c0_i32_0 : i32, i32
  }
  func.func @transform_10(%arg0: i32) -> (i32, i32) {
    %c0_i32 = arith.constant 0 : i32
    %c0_i32_0 = arith.constant 0 : i32
    %c0_i32_1 = arith.constant 0 : i32
    return %c0_i32, %c0_i32_0 : i32, i32
  }
  func.func @transform_11(%arg0: i32) -> (i32, i32) {
    %c0_i32 = arith.constant 0 : i32
    %c0_i32_0 = arith.constant 0 : i32
    %c0_i32_1 = arith.constant 0 : i32
    return %c0_i32, %c0_i32_0 : i32, i32
  }
  func.func @transform_12(%arg0: i32) -> (i32, i32) {
    %c0_i32 = arith.constant 0 : i32
    %c0_i32_0 = arith.constant 0 : i32
    %c0_i32_1 = arith.constant 0 : i32
    return %c0_i32, %c0_i32_0 : i32, i32
  }
  func.func @transform_13(%arg0: i32) -> (i32, i32) {
    %c0_i32 = arith.constant 0 : i32
    %c0_i32_0 = arith.constant 0 : i32
    %c0_i32_1 = arith.constant 0 : i32
    return %c0_i32, %c0_i32_0 : i32, i32
  }
  func.func @transform_14(%arg0: i32) -> (i32, i32) {
    %c0_i32 = arith.constant 0 : i32
    %c0_i32_0 = arith.constant 0 : i32
    %c0_i32_1 = arith.constant 0 : i32
    return %c0_i32, %c0_i32_0 : i32, i32
  }
  func.func @transform_15(%arg0: i32) -> (i32, i32) {
    %c0_i32 = arith.constant 0 : i32
    %c0_i32_0 = arith.constant 0 : i32
    %c0_i32_1 = arith.constant 0 : i32
    return %c0_i32, %c0_i32_0 : i32, i32
  }
  func.func @transform_16(%arg0: i32) -> (i32, i32) {
    %c0_i32 = arith.constant 0 : i32
    %c0_i32_0 = arith.constant 0 : i32
    return %arg0, %c0_i32 : i32, i32
  }
}

</mosaic_0001>

<llo_original>
// kernel: tpu_custom_call.1
$region0: #{tpu_custom_call.1}
  #allocation0 [shape = 'u32[]', space=smem, size = 0x4, offset = 0x4, fixed_abs, tag = 'smem constant byte address 0x4 - core index']
  #allocation1 [shape = 'u32[144,128]{1,0:T(1,128)}', space=vmem, size = 0x12000, scoped, tag = 'internal scratch']
  #allocation2 [shape = 'f32[1,1]{1,0:T(1,128)S(1)}', space=vmem, size = 0x200, scoped, tag = 'scoped memory for tpu_custom_call.1']
  %s0 = inlined_call_operand.vmem [shape: f32[8,6], index: 0, kind: input, shape index: {}]
  %s1 = inlined_call_operand.vmem [shape: f32[8,10], index: 1, kind: input, shape index: {}]
  %s2 = inlined_call_operand.vmem [shape: f32[6,32], index: 2, kind: input, shape index: {}]
  %s3 = inlined_call_operand.vmem [shape: f32[1,32], index: 3, kind: input, shape index: {}]
  %s4 = inlined_call_operand.vmem [shape: f32[10,16], index: 4, kind: input, shape index: {}]
  %s5 = inlined_call_operand.vmem [shape: f32[1,16], index: 5, kind: input, shape index: {}]
  %s6 = inlined_call_operand.vmem [shape: f32[10,32], index: 6, kind: input, shape index: {}]
  %s7 = inlined_call_operand.vmem [shape: f32[1,32], index: 7, kind: input, shape index: {}]
  %s8 = inlined_call_operand.vmem [shape: f32[48,32], index: 8, kind: input, shape index: {}]
  %s9 = inlined_call_operand.vmem [shape: f32[1,32], index: 9, kind: input, shape index: {}]
  %s10 = inlined_call_operand.vmem [shape: f32[32,16], index: 10, kind: input, shape index: {}]
  %s11 = inlined_call_operand.vmem [shape: f32[1,16], index: 11, kind: input, shape index: {}]
  %s12 = inlined_call_operand.vmem [shape: f32[32,32], index: 12, kind: input, shape index: {}]
  %s13 = inlined_call_operand.vmem [shape: f32[1,32], index: 13, kind: input, shape index: {}]
  %s14 = inlined_call_operand.vmem [shape: f32[80,1], index: 14, kind: input, shape index: {}]
  %s15 = inlined_call_operand.<no memory space> [shape: f32[1,1], index: 15, kind: input, shape index: {}]
  %s16 = inlined_call_operand.vmem [shape: f32[8,1], index: 16, kind: output, shape index: {}]
  %s17 = sld [smem:[#allocation0]]
  $region74: #{tpu_custom_call.1} parent=0
    _
  %s19 = ssub.s32 1, %s17
  %s20 = scalar_select 0, %s19, %s17
  %v21 = vstv %s15
  %22 = vst [vmem:[#allocation2] sm:$0x1] %v21
  // Predicated region
  $region2: #{tpu_custom_call.1} parent=0 // pred_check
    _
  $region3: #{tpu_custom_call.1} parent=0 // pred_check_branch
    %24 = sbr.rel (0) target = $region5
  $region4: #{tpu_custom_call.1} parent=0 // pred_region
    _
  $region5: #{tpu_custom_call.1} parent=0 // pred_fallthru
    _
  // Predicated region
  $region6: #{tpu_custom_call.1} parent=0 // pred_check
    _
  $region7: #{tpu_custom_call.1} parent=0 // pred_check_branch
    %26 = sbr.rel (0) target = $region9
  $region8: #{tpu_custom_call.1} parent=0 // pred_region
    _
  $region9: #{tpu_custom_call.1} parent=0 // pred_fallthru
    _
  // Predicated region
  $region10: #{tpu_custom_call.1} parent=0 // pred_check
    _
  $region11: #{tpu_custom_call.1} parent=0 // pred_check_branch
    %28 = sbr.rel (0) target = $region13
  $region12: #{tpu_custom_call.1} parent=0 // pred_region
    _
  $region13: #{tpu_custom_call.1} parent=0 // pred_fallthru
    _
  // Predicated region
  $region14: #{tpu_custom_call.1} parent=0 // pred_check
    _
  $region15: #{tpu_custom_call.1} parent=0 // pred_check_branch
    %30 = sbr.rel (0) target = $region17
  $region16: #{tpu_custom_call.1} parent=0 // pred_region
    _
  $region17: #{tpu_custom_call.1} parent=0 // pred_fallthru
    _
  // Predicated region
  $region18: #{tpu_custom_call.1} parent=0 // pred_check
    _
  $region19: #{tpu_custom_call.1} parent=0 // pred_check_branch
    %32 = sbr.rel (0) target = $region21
  $region20: #{tpu_custom_call.1} parent=0 // pred_region
    _
  $region21: #{tpu_custom_call.1} parent=0 // pred_fallthru
    _
  // Predicated region
  $region22: #{tpu_custom_call.1} parent=0 // pred_check
    _
  $region23: #{tpu_custom_call.1} parent=0 // pred_check_branch
    %34 = sbr.rel (0) target = $region25
  $region24: #{tpu_custom_call.1} parent=0 // pred_region
    _
  $region25: #{tpu_custom_call.1} parent=0 // pred_fallthru
    _
  // Predicated region
  $region26: #{tpu_custom_call.1} parent=0 // pred_check
    _
  $region27: #{tpu_custom_call.1} parent=0 // pred_check_branch
    %36 = sbr.rel (0) target = $region29
  $region28: #{tpu_custom_call.1} parent=0 // pred_region
    _
  $region29: #{tpu_custom_call.1} parent=0 // pred_fallthru
    _
  // Predicated region
  $region30: #{tpu_custom_call.1} parent=0 // pred_check
    _
  $region31: #{tpu_custom_call.1} parent=0 // pred_check_branch
    %38 = sbr.rel (0) target = $region33
  $region32: #{tpu_custom_call.1} parent=0 // pred_region
    _
  $region33: #{tpu_custom_call.1} parent=0 // pred_fallthru
    _
  // Predicated region
  $region34: #{tpu_custom_call.1} parent=0 // pred_check
    _
  $region35: #{tpu_custom_call.1} parent=0 // pred_check_branch
    %40 = sbr.rel (0) target = $region37
  $region36: #{tpu_custom_call.1} parent=0 // pred_region
    _
  $region37: #{tpu_custom_call.1} parent=0 // pred_fallthru
    _
  // Predicated region
  $region38: #{tpu_custom_call.1} parent=0 // pred_check
    _
  $region39: #{tpu_custom_call.1} parent=0 // pred_check_branch
    %42 = sbr.rel (0) target = $region41
  $region40: #{tpu_custom_call.1} parent=0 // pred_region
    _
  $region41: #{tpu_custom_call.1} parent=0 // pred_fallthru
    _
  // Predicated region
  $region42: #{tpu_custom_call.1} parent=0 // pred_check
    _
  $region43: #{tpu_custom_call.1} parent=0 // pred_check_branch
    %44 = sbr.rel (0) target = $region45
  $region44: #{tpu_custom_call.1} parent=0 // pred_region
    _
  $region45: #{tpu_custom_call.1} parent=0 // pred_fallthru
    _
  // Predicated region
  $region46: #{tpu_custom_call.1} parent=0 // pred_check
    _
  $region47: #{tpu_custom_call.1} parent=0 // pred_check_branch
    %46 = sbr.rel (0) target = $region49
  $region48: #{tpu_custom_call.1} parent=0 // pred_region
    _
  $region49: #{tpu_custom_call.1} parent=0 // pred_fallthru
    _
  // Predicated region
  $region50: #{tpu_custom_call.1} parent=0 // pred_check
    _
  $region51: #{tpu_custom_call.1} parent=0 // pred_check_branch
    %48 = sbr.rel (0) target = $region53
  $region52: #{tpu_custom_call.1} parent=0 // pred_region
    _
  $region53: #{tpu_custom_call.1} parent=0 // pred_fallthru
    _
  // Predicated region
  $region54: #{tpu_custom_call.1} parent=0 // pred_check
    _
  $region55: #{tpu_custom_call.1} parent=0 // pred_check_branch
    %50 = sbr.rel (0) target = $region57
  $region56: #{tpu_custom_call.1} parent=0 // pred_region
    _
  $region57: #{tpu_custom_call.1} parent=0 // pred_fallthru
    _
  // Predicated region
  $region58: #{tpu_custom_call.1} parent=0 // pred_check
    _
  $region59: #{tpu_custom_call.1} parent=0 // pred_check_branch
    %52 = sbr.rel (0) target = $region61
  $region60: #{tpu_custom_call.1} parent=0 // pred_region
    _
  $region61: #{tpu_custom_call.1} parent=0 // pred_fallthru
    _
  // Predicated region
  $region62: #{tpu_custom_call.1} parent=0 // pred_check
    _
  $region63: #{tpu_custom_call.1} parent=0 // pred_check_branch
    %54 = sbr.rel (0) target = $region65
  $region64: #{tpu_custom_call.1} parent=0 // pred_region
    _
  $region65: #{tpu_custom_call.1} parent=0 // pred_fallthru
    _
  %v55 = vld [vmem:[%s0] sm:$0xff]
  %v56 = vld [vmem:[%s1] sm:$0xff]
  %v57 = vld [vmem:[%s2] sm:$0x3f]
  %v58 = vmul.f32 %v57, 1.442695
  %v59 = vpow.pop %v58
  %v60 = vld [vmem:[%s3] sm:$0x1]
  %v62 = vlaneseq
  %v63 = vshrl.u32 %v62, 7
  %v64 = vsub.s32 0, %v63
  %v65 = vrot.slane %v60, %v64
  %vm67 = vcmask 48128
  %v69 = vsel %vm67, %v55, 0
  %vm71 = vcmask 1045504
  %v73 = vsel %vm71, %v59, 0
  %75 = vmatprep.subr.mxu0 0.0
  %76 = vmatpush1.msra.mxu0 0.0
  %77 = vmatprep.subr.mxu0 0.0
  %78 = vmatpush1.msra.mxu0 0.0
  %79 = vmatprep.subr.mxu0 0.0
  %80 = vmatpush1.msra.mxu0 0.0
  %81 = vmatprep.subr.mxu0 0.0
  %82 = vmatpush1.msra.mxu0 0.0
  %83 = vmatprep.subr.mxu0 0.0
  %84 = vmatpush1.msra.mxu0 0.0
  %85 = vmatprep.subr.mxu0 0.0
  %86 = vmatpush1.msra.mxu0 0.0
  %87 = vmatprep.subr.mxu0 0.0
  %88 = vmatpush1.msra.mxu0 0.0
  %89 = vmatprep.subr.mxu0 0.0
  %90 = vmatpush1.msra.mxu0 0.0
  %91 = vmatprep.subr.mxu0 0.0
  %92 = vmatpush1.msra.mxu0 0.0
  %93 = vmatprep.subr.mxu0 0.0
  %94 = vmatpush1.msra.mxu0 0.0
  %95 = vmatprep.subr.mxu0 0.0
  %96 = vmatpush1.msra.mxu0 0.0
  %97 = vmatprep.subr.mxu0 0.0
  %98 = vmatpush1.msra.mxu0 0.0
  %99 = vmatprep.subr.mxu0 0.0
  %100 = vmatpush1.msra.mxu0 0.0
  %101 = vmatprep.subr.mxu0 0.0
  %102 = vmatpush1.msra.mxu0 0.0
  %103 = vmatprep.subr.mxu0 0.0
  %104 = vmatpush1.msra.mxu0 0.0
  %105 = vmatprep.subr.mxu0 0.0
  %106 = vmatpush1.msra.mxu0 %v73
  %107 = vmatprep.subr.mxu0 0.0
  %108 = vmatpush2.msra.mxu0 0.0
  %109 = vmatprep.subr.mxu0 0.0
  %110 = vmatpush2.msra.mxu0 0.0
  %111 = vmatprep.subr.mxu0 0.0
  %112 = vmatpush2.msra.mxu0 0.0
  %113 = vmatprep.subr.mxu0 0.0
  %114 = vmatpush2.msra.mxu0 0.0
  %115 = vmatprep.subr.mxu0 0.0
  %116 = vmatpush2.msra.mxu0 0.0
  %117 = vmatprep.subr.mxu0 0.0
  %118 = vmatpush2.msra.mxu0 0.0
  %119 = vmatprep.subr.mxu0 0.0
  %120 = vmatpush2.msra.mxu0 0.0
  %121 = vmatprep.subr.mxu0 0.0
  %122 = vmatpush2.msra.mxu0 0.0
  %123 = vmatprep.subr.mxu0 0.0
  %124 = vmatpush2.msra.mxu0 0.0
  %125 = vmatprep.subr.mxu0 0.0
  %126 = vmatpush2.msra.mxu0 0.0
  %127 = vmatprep.subr.mxu0 0.0
  %128 = vmatpush2.msra.mxu0 0.0
  %129 = vmatprep.subr.mxu0 0.0
  %130 = vmatpush2.msra.mxu0 0.0
  %131 = vmatprep.subr.mxu0 0.0
  %132 = vmatpush2.msra.mxu0 0.0
  %133 = vmatprep.subr.mxu0 0.0
  %134 = vmatpush2.msra.mxu0 0.0
  %135 = vmatprep.subr.mxu0 0.0
  %136 = vmatpush2.msra.mxu0 0.0
  %137 = vmatprep.subr.mxu0 0.0
  %138 = vmatpush2.msra.mxu0 0.0
  %139 = vmatprep.mubr.f32.mxu0 0.0
  %140 = vmatmul.mubr.f32.gmra.mxu0 %v69
  %v141 = vpop.f32.mrf.mxu0
  %v142 = vadd.f32 %v65, %v141
  %v143 = vpop.f32.mrf.mxu0
  %144 = vdwg.mxu0
  %v145 = vld [vmem:[%s4] sm:$0xff]
  %v146 = vld [vmem:[%s4 + $0x8] sm:$0x3]
  %v147 = vld [vmem:[%s5] sm:$0x1]
  %v149 = vlaneseq
  %v150 = vshrl.u32 %v149, 7
  %v151 = vsub.s32 0, %v150
  %v152 = vrot.slane %v147, %v151
  %vm154 = vcmask 80896
  %v156 = vsel %vm154, %v56, 0
  %vm158 = vcmask 1041408
  %v160 = vsel %vm158, %v146, 0
  %162 = vmatprep.subr.mxu0 0.0
  %163 = vmatpush1.msra.mxu0 0.0
  %164 = vmatprep.subr.mxu0 0.0
  %165 = vmatpush1.msra.mxu0 0.0
  %166 = vmatprep.subr.mxu0 0.0
  %167 = vmatpush1.msra.mxu0 0.0
  %168 = vmatprep.subr.mxu0 0.0
  %169 = vmatpush1.msra.mxu0 0.0
  %170 = vmatprep.subr.mxu0 0.0
  %171 = vmatpush1.msra.mxu0 0.0
  %172 = vmatprep.subr.mxu0 0.0
  %173 = vmatpush1.msra.mxu0 0.0
  %174 = vmatprep.subr.mxu0 0.0
  %175 = vmatpush1.msra.mxu0 0.0
  %176 = vmatprep.subr.mxu0 0.0
  %177 = vmatpush1.msra.mxu0 0.0
  %178 = vmatprep.subr.mxu0 0.0
  %179 = vmatpush1.msra.mxu0 0.0
  %180 = vmatprep.subr.mxu0 0.0
  %181 = vmatpush1.msra.mxu0 0.0
  %182 = vmatprep.subr.mxu0 0.0
  %183 = vmatpush1.msra.mxu0 0.0
  %184 = vmatprep.subr.mxu0 0.0
  %185 = vmatpush1.msra.mxu0 0.0
  %186 = vmatprep.subr.mxu0 0.0
  %187 = vmatpush1.msra.mxu0 0.0
  %188 = vmatprep.subr.mxu0 0.0
  %189 = vmatpush1.msra.mxu0 0.0
  %190 = vmatprep.subr.mxu0 0.0
  %191 = vmatpush1.msra.mxu0 %v160
  %192 = vmatprep.subr.mxu0 0.0
  %193 = vmatpush1.msra.mxu0 %v145
  %194 = vmatprep.subr.mxu0 0.0
  %195 = vmatpush2.msra.mxu0 0.0
  %196 = vmatprep.subr.mxu0 0.0
  %197 = vmatpush2.msra.mxu0 0.0
  %198 = vmatprep.subr.mxu0 0.0
  %199 = vmatpush2.msra.mxu0 0.0
  %200 = vmatprep.subr.mxu0 0.0
  %201 = vmatpush2.msra.mxu0 0.0
  %202 = vmatprep.subr.mxu0 0.0
  %203 = vmatpush2.msra.mxu0 0.0
  %204 = vmatprep.subr.mxu0 0.0
  %205 = vmatpush2.msra.mxu0 0.0
  %206 = vmatprep.subr.mxu0 0.0
  %207 = vmatpush2.msra.mxu0 0.0
  %208 = vmatprep.subr.mxu0 0.0
  %209 = vmatpush2.msra.mxu0 0.0
  %210 = vmatprep.subr.mxu0 0.0
  %211 = vmatpush2.msra.mxu0 0.0
  %212 = vmatprep.subr.mxu0 0.0
  %213 = vmatpush2.msra.mxu0 0.0
  %214 = vmatprep.subr.mxu0 0.0
  %215 = vmatpush2.msra.mxu0 0.0
  %216 = vmatprep.subr.mxu0 0.0
  %217 = vmatpush2.msra.mxu0 0.0
  %218 = vmatprep.subr.mxu0 0.0
  %219 = vmatpush2.msra.mxu0 0.0
  %220 = vmatprep.subr.mxu0 0.0
  %221 = vmatpush2.msra.mxu0 0.0
  %222 = vmatprep.subr.mxu0 0.0
  %223 = vmatpush2.msra.mxu0 0.0
  %224 = vmatprep.subr.mxu0 0.0
  %225 = vmatpush2.msra.mxu0 0.0
  %226 = vmatprep.mubr.f32.mxu0 0.0
  %227 = vmatmul.mubr.f32.gmra.mxu0 %v156
  %v228 = vpop.f32.mrf.mxu0
  %v229 = vadd.f32 %v152, %v228
  %v230 = vpop.f32.mrf.mxu0
  %231 = vdwg.mxu0
  %v232 = vld [vmem:[%s6] sm:$0xff]
  %v233 = vld [vmem:[%s6 + $0x8] sm:$0x3]
  %v234 = vld [vmem:[%s7] sm:$0x1]
  %v236 = vlaneseq
  %v237 = vshrl.u32 %v236, 7
  %v238 = vsub.s32 0, %v237
  %v239 = vrot.slane %v234, %v238
  %v242 = vsel %vm158, %v233, 0
  %244 = vmatprep.subr.mxu0 0.0
  %245 = vmatpush1.msra.mxu0 0.0
  %246 = vmatprep.subr.mxu0 0.0
  %247 = vmatpush1.msra.mxu0 0.0
  %248 = vmatprep.subr.mxu0 0.0
  %249 = vmatpush1.msra.mxu0 0.0
  %250 = vmatprep.subr.mxu0 0.0
  %251 = vmatpush1.msra.mxu0 0.0
  %252 = vmatprep.subr.mxu0 0.0
  %253 = vmatpush1.msra.mxu0 0.0
  %254 = vmatprep.subr.mxu0 0.0
  %255 = vmatpush1.msra.mxu0 0.0
  %256 = vmatprep.subr.mxu0 0.0
  %257 = vmatpush1.msra.mxu0 0.0
  %258 = vmatprep.subr.mxu0 0.0
  %259 = vmatpush1.msra.mxu0 0.0
  %260 = vmatprep.subr.mxu0 0.0
  %261 = vmatpush1.msra.mxu0 0.0
  %262 = vmatprep.subr.mxu0 0.0
  %263 = vmatpush1.msra.mxu0 0.0
  %264 = vmatprep.subr.mxu0 0.0
  %265 = vmatpush1.msra.mxu0 0.0
  %266 = vmatprep.subr.mxu0 0.0
  %267 = vmatpush1.msra.mxu0 0.0
  %268 = vmatprep.subr.mxu0 0.0
  %269 = vmatpush1.msra.mxu0 0.0
  %270 = vmatprep.subr.mxu0 0.0
  %271 = vmatpush1.msra.mxu0 0.0
  %272 = vmatprep.subr.mxu0 0.0
  %273 = vmatpush1.msra.mxu0 %v242
  %274 = vmatprep.subr.mxu0 0.0
  %275 = vmatpush1.msra.mxu0 %v232
  %276 = vmatprep.subr.mxu0 0.0
  %277 = vmatpush2.msra.mxu0 0.0
  %278 = vmatprep.subr.mxu0 0.0
  %279 = vmatpush2.msra.mxu0 0.0
  %280 = vmatprep.subr.mxu0 0.0
  %281 = vmatpush2.msra.mxu0 0.0
  %282 = vmatprep.subr.mxu0 0.0
  %283 = vmatpush2.msra.mxu0 0.0
  %284 = vmatprep.subr.mxu0 0.0
  %285 = vmatpush2.msra.mxu0 0.0
  %286 = vmatprep.subr.mxu0 0.0
  %287 = vmatpush2.msra.mxu0 0.0
  %288 = vmatprep.subr.mxu0 0.0
  %289 = vmatpush2.msra.mxu0 0.0
  %290 = vmatprep.subr.mxu0 0.0
  %291 = vmatpush2.msra.mxu0 0.0
  %292 = vmatprep.subr.mxu0 0.0
  %293 = vmatpush2.msra.mxu0 0.0
  %294 = vmatprep.subr.mxu0 0.0
  %295 = vmatpush2.msra.mxu0 0.0
  %296 = vmatprep.subr.mxu0 0.0
  %297 = vmatpush2.msra.mxu0 0.0
  %298 = vmatprep.subr.mxu0 0.0
  %299 = vmatpush2.msra.mxu0 0.0
  %300 = vmatprep.subr.mxu0 0.0
  %301 = vmatpush2.msra.mxu0 0.0
  %302 = vmatprep.subr.mxu0 0.0
  %303 = vmatpush2.msra.mxu0 0.0
  %304 = vmatprep.subr.mxu0 0.0
  %305 = vmatpush2.msra.mxu0 0.0
  %306 = vmatprep.subr.mxu0 0.0
  %307 = vmatpush2.msra.mxu0 0.0
  %308 = vmatprep.mubr.f32.mxu0 0.0
  %309 = vmatmul.mubr.f32.gmra.mxu0 %v156
  %v310 = vpop.f32.mrf.mxu0
  %v311 = vadd.f32 %v239, %v310
  %v312 = vpop.f32.mrf.mxu0
  %313 = vdwg.mxu0
  %v314 = vmax.f32 %v142, 0.0
  %v315 = vmin.f32 %v314, 1.0
  %v316 = vmul.f32 %v315, 0.99
  %v317 = vmul.f32 %v142, 0.01
  %v318 = vadd.f32 %v316, %v317
  %v319 = vmax.f32 %v229, 0.0
  %v320 = vmin.f32 %v319, 1.0
  %v321 = vmul.f32 %v320, 0.99
  %v322 = vmul.f32 %v229, 0.01
  %v323 = vadd.f32 %v321, %v322
  %v324 = vmax.f32 %v311, 0.0
  %v325 = vld [vmem:[%s8] sm:$0xff]
  %v326 = vld [vmem:[%s8 + $0x8] sm:$0xff]
  %v327 = vld [vmem:[%s8 + $0x10] sm:$0xff]
  %v328 = vld [vmem:[%s8 + $0x18] sm:$0xff]
  %v329 = vld [vmem:[%s8 + $0x20] sm:$0xff]
  %v330 = vld [vmem:[%s8 + $0x28] sm:$0xff]
  %v331 = vmul.f32 %v325, 1.442695
  %v332 = vpow.pop %v331
  %v333 = vmul.f32 %v326, 1.442695
  %v334 = vpow.pop %v333
  %v335 = vmul.f32 %v327, 1.442695
  %v336 = vpow.pop %v335
  %v337 = vmul.f32 %v328, 1.442695
  %v338 = vpow.pop %v337
  %v339 = vmul.f32 %v329, 1.442695
  %v340 = vpow.pop %v339
  %v341 = vmul.f32 %v330, 1.442695
  %v342 = vpow.pop %v341
  %v343 = vld [vmem:[%s9] sm:$0x1]
  %vm344 = vcmask 130048
  %v346 = vsel %vm344, %v323, 0
  %348 = vmatprep.subr.mxu0 0.0
  %349 = vmatpush1.msra.mxu0 0.0
  %350 = vmatprep.subr.mxu0 0.0
  %351 = vmatpush1.msra.mxu0 0.0
  %352 = vmatprep.subr.mxu0 0.0
  %353 = vmatpush1.msra.mxu0 0.0
  %354 = vmatprep.subr.mxu0 0.0
  %355 = vmatpush1.msra.mxu0 0.0
  %356 = vmatprep.subr.mxu0 0.0
  %357 = vmatpush1.msra.mxu0 0.0
  %358 = vmatprep.subr.mxu0 0.0
  %359 = vmatpush1.msra.mxu0 0.0
  %360 = vmatprep.subr.mxu0 0.0
  %361 = vmatpush1.msra.mxu0 0.0
  %362 = vmatprep.subr.mxu0 0.0
  %363 = vmatpush1.msra.mxu0 0.0
  %364 = vmatprep.subr.mxu0 0.0
  %365 = vmatpush1.msra.mxu0 0.0
  %366 = vmatprep.subr.mxu0 0.0
  %367 = vmatpush1.msra.mxu0 0.0
  %368 = vmatprep.subr.mxu0 0.0
  %369 = vmatpush1.msra.mxu0 0.0
  %370 = vmatprep.subr.mxu0 0.0
  %371 = vmatpush1.msra.mxu0 0.0
  %372 = vmatprep.subr.mxu0 0.0
  %373 = vmatpush1.msra.mxu0 0.0
  %374 = vmatprep.subr.mxu0 0.0
  %375 = vmatpush1.msra.mxu0 0.0
  %376 = vmatprep.subr.mxu0 0.0
  %377 = vmatpush1.msra.mxu0 %v342
  %378 = vmatprep.subr.mxu0 0.0
  %379 = vmatpush1.msra.mxu0 %v340
  %380 = vmatprep.subr.mxu0 0.0
  %381 = vmatpush2.msra.mxu0 0.0
  %382 = vmatprep.subr.mxu0 0.0
  %383 = vmatpush2.msra.mxu0 0.0
  %384 = vmatprep.subr.mxu0 0.0
  %385 = vmatpush2.msra.mxu0 0.0
  %386 = vmatprep.subr.mxu0 0.0
  %387 = vmatpush2.msra.mxu0 0.0
  %388 = vmatprep.subr.mxu0 0.0
  %389 = vmatpush2.msra.mxu0 0.0
  %390 = vmatprep.subr.mxu0 0.0
  %391 = vmatpush2.msra.mxu0 0.0
  %392 = vmatprep.subr.mxu0 0.0
  %393 = vmatpush2.msra.mxu0 0.0
  %394 = vmatprep.subr.mxu0 0.0
  %395 = vmatpush2.msra.mxu0 0.0
  %396 = vmatprep.subr.mxu0 0.0
  %397 = vmatpush2.msra.mxu0 0.0
  %398 = vmatprep.subr.mxu0 0.0
  %399 = vmatpush2.msra.mxu0 0.0
  %400 = vmatprep.subr.mxu0 0.0
  %401 = vmatpush2.msra.mxu0 0.0
  %402 = vmatprep.subr.mxu0 0.0
  %403 = vmatpush2.msra.mxu0 0.0
  %404 = vmatprep.subr.mxu0 0.0
  %405 = vmatpush2.msra.mxu0 0.0
  %406 = vmatprep.subr.mxu0 0.0
  %407 = vmatpush2.msra.mxu0 0.0
  %408 = vmatprep.subr.mxu0 0.0
  %409 = vmatpush2.msra.mxu0 0.0
  %410 = vmatprep.subr.mxu0 0.0
  %411 = vmatpush2.msra.mxu0 0.0
  %412 = vmatprep.mubr.f32.mxu0 0.0
  %413 = vmatmul.mubr.f32.gmra.mxu0 %v346
  %v414 = vpop.f32.mrf.mxu0
  %v415 = vadd.f32 0.0, %v414
  %v416 = vpop.f32.mrf.mxu0
  %417 = vdwg.mxu0
  %vm418 = vcmask 261120
  %v420 = vsel %vm418, %v318, 0
  %422 = vmatprep.subr.mxu0 0.0
  %423 = vmatpush1.msra.mxu0 0.0
  %424 = vmatprep.subr.mxu0 0.0
  %425 = vmatpush1.msra.mxu0 0.0
  %426 = vmatprep.subr.mxu0 0.0
  %427 = vmatpush1.msra.mxu0 0.0
  %428 = vmatprep.subr.mxu0 0.0
  %429 = vmatpush1.msra.mxu0 0.0
  %430 = vmatprep.subr.mxu0 0.0
  %431 = vmatpush1.msra.mxu0 0.0
  %432 = vmatprep.subr.mxu0 0.0
  %433 = vmatpush1.msra.mxu0 0.0
  %434 = vmatprep.subr.mxu0 0.0
  %435 = vmatpush1.msra.mxu0 0.0
  %436 = vmatprep.subr.mxu0 0.0
  %437 = vmatpush1.msra.mxu0 0.0
  %438 = vmatprep.subr.mxu0 0.0
  %439 = vmatpush1.msra.mxu0 0.0
  %440 = vmatprep.subr.mxu0 0.0
  %441 = vmatpush1.msra.mxu0 0.0
  %442 = vmatprep.subr.mxu0 0.0
  %443 = vmatpush1.msra.mxu0 0.0
  %444 = vmatprep.subr.mxu0 0.0
  %445 = vmatpush1.msra.mxu0 0.0
  %446 = vmatprep.subr.mxu0 0.0
  %447 = vmatpush1.msra.mxu0 %v338
  %448 = vmatprep.subr.mxu0 0.0
  %449 = vmatpush1.msra.mxu0 %v336
  %450 = vmatprep.subr.mxu0 0.0
  %451 = vmatpush1.msra.mxu0 %v334
  %452 = vmatprep.subr.mxu0 0.0
  %453 = vmatpush1.msra.mxu0 %v332
  %454 = vmatprep.subr.mxu0 0.0
  %455 = vmatpush2.msra.mxu0 0.0
  %456 = vmatprep.subr.mxu0 0.0
  %457 = vmatpush2.msra.mxu0 0.0
  %458 = vmatprep.subr.mxu0 0.0
  %459 = vmatpush2.msra.mxu0 0.0
  %460 = vmatprep.subr.mxu0 0.0
  %461 = vmatpush2.msra.mxu0 0.0
  %462 = vmatprep.subr.mxu0 0.0
  %463 = vmatpush2.msra.mxu0 0.0
  %464 = vmatprep.subr.mxu0 0.0
  %465 = vmatpush2.msra.mxu0 0.0
  %466 = vmatprep.subr.mxu0 0.0
  %467 = vmatpush2.msra.mxu0 0.0
  %468 = vmatprep.subr.mxu0 0.0
  %469 = vmatpush2.msra.mxu0 0.0
  %470 = vmatprep.subr.mxu0 0.0
  %471 = vmatpush2.msra.mxu0 0.0
  %472 = vmatprep.subr.mxu0 0.0
  %473 = vmatpush2.msra.mxu0 0.0
  %474 = vmatprep.subr.mxu0 0.0
  %475 = vmatpush2.msra.mxu0 0.0
  %476 = vmatprep.subr.mxu0 0.0
  %477 = vmatpush2.msra.mxu0 0.0
  %478 = vmatprep.subr.mxu0 0.0
  %479 = vmatpush2.msra.mxu0 0.0
  %480 = vmatprep.subr.mxu0 0.0
  %481 = vmatpush2.msra.mxu0 0.0
  %482 = vmatprep.subr.mxu0 0.0
  %483 = vmatpush2.msra.mxu0 0.0
  %484 = vmatprep.subr.mxu0 0.0
  %485 = vmatpush2.msra.mxu0 0.0
  %486 = vmatprep.mubr.f32.mxu0 0.0
  %487 = vmatmul.mubr.f32.gmra.mxu0 %v420
  %v488 = vpop.f32.mrf.mxu0
  %v489 = vadd.f32 %v415, %v488
  %v490 = vpop.f32.mrf.mxu0
  %491 = vdwg.mxu0
  %v493 = vlaneseq
  %v494 = vshrl.u32 %v493, 7
  %v495 = vsub.s32 0, %v494
  %v496 = vrot.slane %v343, %v495
  %v498 = vadd.f32 %v489, %v496
  %v499 = vld [vmem:[%s10] sm:$0xff]
  %v500 = vld [vmem:[%s10 + $0x8] sm:$0xff]
  %v501 = vld [vmem:[%s10 + $0x10] sm:$0xff]
  %v502 = vld [vmem:[%s10 + $0x18] sm:$0xff]
  %v503 = vld [vmem:[%s11] sm:$0x1]
  %v505 = vlaneseq
  %v506 = vshrl.u32 %v505, 7
  %v507 = vsub.s32 0, %v506
  %v508 = vrot.slane %v503, %v507
  %v511 = vsel %vm418, %v324, 0
  %513 = vmatprep.subr.mxu0 0.0
  %514 = vmatpush1.msra.mxu0 0.0
  %515 = vmatprep.subr.mxu0 0.0
  %516 = vmatpush1.msra.mxu0 0.0
  %517 = vmatprep.subr.mxu0 0.0
  %518 = vmatpush1.msra.mxu0 0.0
  %519 = vmatprep.subr.mxu0 0.0
  %520 = vmatpush1.msra.mxu0 0.0
  %521 = vmatprep.subr.mxu0 0.0
  %522 = vmatpush1.msra.mxu0 0.0
  %523 = vmatprep.subr.mxu0 0.0
  %524 = vmatpush1.msra.mxu0 0.0
  %525 = vmatprep.subr.mxu0 0.0
  %526 = vmatpush1.msra.mxu0 0.0
  %527 = vmatprep.subr.mxu0 0.0
  %528 = vmatpush1.msra.mxu0 0.0
  %529 = vmatprep.subr.mxu0 0.0
  %530 = vmatpush1.msra.mxu0 0.0
  %531 = vmatprep.subr.mxu0 0.0
  %532 = vmatpush1.msra.mxu0 0.0
  %533 = vmatprep.subr.mxu0 0.0
  %534 = vmatpush1.msra.mxu0 0.0
  %535 = vmatprep.subr.mxu0 0.0
  %536 = vmatpush1.msra.mxu0 0.0
  %537 = vmatprep.subr.mxu0 0.0
  %538 = vmatpush1.msra.mxu0 %v502
  %539 = vmatprep.subr.mxu0 0.0
  %540 = vmatpush1.msra.mxu0 %v501
  %541 = vmatprep.subr.mxu0 0.0
  %542 = vmatpush1.msra.mxu0 %v500
  %543 = vmatprep.subr.mxu0 0.0
  %544 = vmatpush1.msra.mxu0 %v499
  %545 = vmatprep.subr.mxu0 0.0
  %546 = vmatpush2.msra.mxu0 0.0
  %547 = vmatprep.subr.mxu0 0.0
  %548 = vmatpush2.msra.mxu0 0.0
  %549 = vmatprep.subr.mxu0 0.0
  %550 = vmatpush2.msra.mxu0 0.0
  %551 = vmatprep.subr.mxu0 0.0
  %552 = vmatpush2.msra.mxu0 0.0
  %553 = vmatprep.subr.mxu0 0.0
  %554 = vmatpush2.msra.mxu0 0.0
  %555 = vmatprep.subr.mxu0 0.0
  %556 = vmatpush2.msra.mxu0 0.0
  %557 = vmatprep.subr.mxu0 0.0
  %558 = vmatpush2.msra.mxu0 0.0
  %559 = vmatprep.subr.mxu0 0.0
  %560 = vmatpush2.msra.mxu0 0.0
  %561 = vmatprep.subr.mxu0 0.0
  %562 = vmatpush2.msra.mxu0 0.0
  %563 = vmatprep.subr.mxu0 0.0
  %564 = vmatpush2.msra.mxu0 0.0
  %565 = vmatprep.subr.mxu0 0.0
  %566 = vmatpush2.msra.mxu0 0.0
  %567 = vmatprep.subr.mxu0 0.0
  %568 = vmatpush2.msra.mxu0 0.0
  %569 = vmatprep.subr.mxu0 0.0
  %570 = vmatpush2.msra.mxu0 0.0
  %571 = vmatprep.subr.mxu0 0.0
  %572 = vmatpush2.msra.mxu0 0.0
  %573 = vmatprep.subr.mxu0 0.0
  %574 = vmatpush2.msra.mxu0 0.0
  %575 = vmatprep.subr.mxu0 0.0
  %576 = vmatpush2.msra.mxu0 0.0
  %577 = vmatprep.mubr.f32.mxu0 0.0
  %578 = vmatmul.mubr.f32.gmra.mxu0 %v511
  %v579 = vpop.f32.mrf.mxu0
  %v580 = vadd.f32 %v508, %v579
  %v581 = vpop.f32.mrf.mxu0
  %582 = vdwg.mxu0
  %v583 = vld [vmem:[%s12] sm:$0xff]
  %v584 = vld [vmem:[%s12 + $0x8] sm:$0xff]
  %v585 = vld [vmem:[%s12 + $0x10] sm:$0xff]
  %v586 = vld [vmem:[%s12 + $0x18] sm:$0xff]
  %v587 = vld [vmem:[%s13] sm:$0x1]
  %v589 = vlaneseq
  %v590 = vshrl.u32 %v589, 7
  %v591 = vsub.s32 0, %v590
  %v592 = vrot.slane %v587, %v591
  %594 = vmatprep.subr.mxu0 0.0
  %595 = vmatpush1.msra.mxu0 0.0
  %596 = vmatprep.subr.mxu0 0.0
  %597 = vmatpush1.msra.mxu0 0.0
  %598 = vmatprep.subr.mxu0 0.0
  %599 = vmatpush1.msra.mxu0 0.0
  %600 = vmatprep.subr.mxu0 0.0
  %601 = vmatpush1.msra.mxu0 0.0
  %602 = vmatprep.subr.mxu0 0.0
  %603 = vmatpush1.msra.mxu0 0.0
  %604 = vmatprep.subr.mxu0 0.0
  %605 = vmatpush1.msra.mxu0 0.0
  %606 = vmatprep.subr.mxu0 0.0
  %607 = vmatpush1.msra.mxu0 0.0
  %608 = vmatprep.subr.mxu0 0.0
  %609 = vmatpush1.msra.mxu0 0.0
  %610 = vmatprep.subr.mxu0 0.0
  %611 = vmatpush1.msra.mxu0 0.0
  %612 = vmatprep.subr.mxu0 0.0
  %613 = vmatpush1.msra.mxu0 0.0
  %614 = vmatprep.subr.mxu0 0.0
  %615 = vmatpush1.msra.mxu0 0.0
  %616 = vmatprep.subr.mxu0 0.0
  %617 = vmatpush1.msra.mxu0 0.0
  %618 = vmatprep.subr.mxu0 0.0
  %619 = vmatpush1.msra.mxu0 %v586
  %620 = vmatprep.subr.mxu0 0.0
  %621 = vmatpush1.msra.mxu0 %v585
  %622 = vmatprep.subr.mxu0 0.0
  %623 = vmatpush1.msra.mxu0 %v584
  %624 = vmatprep.subr.mxu0 0.0
  %625 = vmatpush1.msra.mxu0 %v583
  %626 = vmatprep.subr.mxu0 0.0
  %627 = vmatpush2.msra.mxu0 0.0
  %628 = vmatprep.subr.mxu0 0.0
  %629 = vmatpush2.msra.mxu0 0.0
  %630 = vmatprep.subr.mxu0 0.0
  %631 = vmatpush2.msra.mxu0 0.0
  %632 = vmatprep.subr.mxu0 0.0
  %633 = vmatpush2.msra.mxu0 0.0
  %634 = vmatprep.subr.mxu0 0.0
  %635 = vmatpush2.msra.mxu0 0.0
  %636 = vmatprep.subr.mxu0 0.0
  %637 = vmatpush2.msra.mxu0 0.0
  %638 = vmatprep.subr.mxu0 0.0
  %639 = vmatpush2.msra.mxu0 0.0
  %640 = vmatprep.subr.mxu0 0.0
  %641 = vmatpush2.msra.mxu0 0.0
  %642 = vmatprep.subr.mxu0 0.0
  %643 = vmatpush2.msra.mxu0 0.0
  %644 = vmatprep.subr.mxu0 0.0
  %645 = vmatpush2.msra.mxu0 0.0
  %646 = vmatprep.subr.mxu0 0.0
  %647 = vmatpush2.msra.mxu0 0.0
  %648 = vmatprep.subr.mxu0 0.0
  %649 = vmatpush2.msra.mxu0 0.0
  %650 = vmatprep.subr.mxu0 0.0
  %651 = vmatpush2.msra.mxu0 0.0
  %652 = vmatprep.subr.mxu0 0.0
  %653 = vmatpush2.msra.mxu0 0.0
  %654 = vmatprep.subr.mxu0 0.0
  %655 = vmatpush2.msra.mxu0 0.0
  %656 = vmatprep.subr.mxu0 0.0
  %657 = vmatpush2.msra.mxu0 0.0
  %658 = vmatprep.mubr.f32.mxu0 0.0
  %659 = vmatmul.mubr.f32.gmra.mxu0 %v511
  %v660 = vpop.f32.mrf.mxu0
  %v661 = vadd.f32 %v592, %v660
  %v662 = vpop.f32.mrf.mxu0
  %663 = vdwg.mxu0
  %v664 = vmax.f32 %v498, 0.0
  %v665 = vmin.f32 %v664, 1.0
  %v666 = vmul.f32 %v665, 0.99
  %v667 = vmul.f32 %v498, 0.01
  %v668 = vadd.f32 %v666, %v667
  %v669 = vmax.f32 %v580, 0.0
  %v670 = vmin.f32 %v669, 1.0
  %v671 = vmul.f32 %v670, 0.99
  %v672 = vmul.f32 %v580, 0.01
  %v673 = vadd.f32 %v671, %v672
  %v674 = vmax.f32 %v661, 0.0
  %v675 = vld [vmem:[%s14] sm:$0xff]
  %v676 = vld [vmem:[%s14 + $0x8] sm:$0xff]
  %v677 = vld [vmem:[%s14 + $0x10] sm:$0xff]
  %v678 = vld [vmem:[%s14 + $0x18] sm:$0xff]
  %v679 = vld [vmem:[%s14 + $0x20] sm:$0xff]
  %v680 = vld [vmem:[%s14 + $0x28] sm:$0xff]
  %v681 = vld [vmem:[%s14 + $0x30] sm:$0xff]
  %v682 = vld [vmem:[%s14 + $0x38] sm:$0xff]
  %v683 = vld [vmem:[%s14 + $0x40] sm:$0xff]
  %v684 = vld [vmem:[%s14 + $0x48] sm:$0xff]
  %v685 = vmul.f32 %v675, 1.442695
  %v686 = vpow.pop %v685
  %v687 = vmul.f32 %v676, 1.442695
  %v688 = vpow.pop %v687
  %v689 = vmul.f32 %v677, 1.442695
  %v690 = vpow.pop %v689
  %v691 = vmul.f32 %v678, 1.442695
  %v692 = vpow.pop %v691
  %v693 = vmul.f32 %v679, 1.442695
  %v694 = vpow.pop %v693
  %v695 = vmul.f32 %v680, 1.442695
  %v696 = vpow.pop %v695
  %v697 = vmul.f32 %v681, 1.442695
  %v698 = vpow.pop %v697
  %v699 = vmul.f32 %v682, 1.442695
  %v700 = vpow.pop %v699
  %v701 = vmul.f32 %v683, 1.442695
  %v702 = vpow.pop %v701
  %v703 = vmul.f32 %v684, 1.442695
  %v704 = vpow.pop %v703
  %v706 = vsel %vm344, %v673, 0
  %708 = vmatprep.subr.mxu0 0.0
  %709 = vmatpush1.msra.mxu0 0.0
  %710 = vmatprep.subr.mxu0 0.0
  %711 = vmatpush1.msra.mxu0 0.0
  %712 = vmatprep.subr.mxu0 0.0
  %713 = vmatpush1.msra.mxu0 0.0
  %714 = vmatprep.subr.mxu0 0.0
  %715 = vmatpush1.msra.mxu0 0.0
  %716 = vmatprep.subr.mxu0 0.0
  %717 = vmatpush1.msra.mxu0 0.0
  %718 = vmatprep.subr.mxu0 0.0
  %719 = vmatpush1.msra.mxu0 0.0
  %720 = vmatprep.subr.mxu0 0.0
  %721 = vmatpush1.msra.mxu0 0.0
  %722 = vmatprep.subr.mxu0 0.0
  %723 = vmatpush1.msra.mxu0 0.0
  %724 = vmatprep.subr.mxu0 0.0
  %725 = vmatpush1.msra.mxu0 0.0
  %726 = vmatprep.subr.mxu0 0.0
  %727 = vmatpush1.msra.mxu0 0.0
  %728 = vmatprep.subr.mxu0 0.0
  %729 = vmatpush1.msra.mxu0 0.0
  %730 = vmatprep.subr.mxu0 0.0
  %731 = vmatpush1.msra.mxu0 0.0
  %732 = vmatprep.subr.mxu0 0.0
  %733 = vmatpush1.msra.mxu0 0.0
  %734 = vmatprep.subr.mxu0 0.0
  %735 = vmatpush1.msra.mxu0 0.0
  %736 = vmatprep.subr.mxu0 0.0
  %737 = vmatpush1.msra.mxu0 %v696
  %738 = vmatprep.subr.mxu0 0.0
  %739 = vmatpush1.msra.mxu0 %v694
  %740 = vmatprep.subr.mxu0 0.0
  %741 = vmatpush2.msra.mxu0 0.0
  %742 = vmatprep.subr.mxu0 0.0
  %743 = vmatpush2.msra.mxu0 0.0
  %744 = vmatprep.subr.mxu0 0.0
  %745 = vmatpush2.msra.mxu0 0.0
  %746 = vmatprep.subr.mxu0 0.0
  %747 = vmatpush2.msra.mxu0 0.0
  %748 = vmatprep.subr.mxu0 0.0
  %749 = vmatpush2.msra.mxu0 0.0
  %750 = vmatprep.subr.mxu0 0.0
  %751 = vmatpush2.msra.mxu0 0.0
  %752 = vmatprep.subr.mxu0 0.0
  %753 = vmatpush2.msra.mxu0 0.0
  %754 = vmatprep.subr.mxu0 0.0
  %755 = vmatpush2.msra.mxu0 0.0
  %756 = vmatprep.subr.mxu0 0.0
  %757 = vmatpush2.msra.mxu0 0.0
  %758 = vmatprep.subr.mxu0 0.0
  %759 = vmatpush2.msra.mxu0 0.0
  %760 = vmatprep.subr.mxu0 0.0
  %761 = vmatpush2.msra.mxu0 0.0
  %762 = vmatprep.subr.mxu0 0.0
  %763 = vmatpush2.msra.mxu0 0.0
  %764 = vmatprep.subr.mxu0 0.0
  %765 = vmatpush2.msra.mxu0 0.0
  %766 = vmatprep.subr.mxu0 0.0
  %767 = vmatpush2.msra.mxu0 0.0
  %768 = vmatprep.subr.mxu0 0.0
  %769 = vmatpush2.msra.mxu0 0.0
  %770 = vmatprep.subr.mxu0 0.0
  %771 = vmatpush2.msra.mxu0 0.0
  %772 = vmatprep.mubr.f32.mxu0 0.0
  %773 = vmatmul.mubr.f32.gmra.mxu0 %v706
  %v774 = vpop.f32.mrf.mxu0
  %v775 = vadd.f32 0.0, %v774
  %v776 = vpop.f32.mrf.mxu0
  %777 = vdwg.mxu0
  %v779 = vsel %vm418, %v668, 0
  %781 = vmatprep.subr.mxu0 0.0
  %782 = vmatpush1.msra.mxu0 0.0
  %783 = vmatprep.subr.mxu0 0.0
  %784 = vmatpush1.msra.mxu0 0.0
  %785 = vmatprep.subr.mxu0 0.0
  %786 = vmatpush1.msra.mxu0 0.0
  %787 = vmatprep.subr.mxu0 0.0
  %788 = vmatpush1.msra.mxu0 0.0
  %789 = vmatprep.subr.mxu0 0.0
  %790 = vmatpush1.msra.mxu0 0.0
  %791 = vmatprep.subr.mxu0 0.0
  %792 = vmatpush1.msra.mxu0 0.0
  %793 = vmatprep.subr.mxu0 0.0
  %794 = vmatpush1.msra.mxu0 0.0
  %795 = vmatprep.subr.mxu0 0.0
  %796 = vmatpush1.msra.mxu0 0.0
  %797 = vmatprep.subr.mxu0 0.0
  %798 = vmatpush1.msra.mxu0 0.0
  %799 = vmatprep.subr.mxu0 0.0
  %800 = vmatpush1.msra.mxu0 0.0
  %801 = vmatprep.subr.mxu0 0.0
  %802 = vmatpush1.msra.mxu0 0.0
  %803 = vmatprep.subr.mxu0 0.0
  %804 = vmatpush1.msra.mxu0 0.0
  %805 = vmatprep.subr.mxu0 0.0
  %806 = vmatpush1.msra.mxu0 %v692
  %807 = vmatprep.subr.mxu0 0.0
  %808 = vmatpush1.msra.mxu0 %v690
  %809 = vmatprep.subr.mxu0 0.0
  %810 = vmatpush1.msra.mxu0 %v688
  %811 = vmatprep.subr.mxu0 0.0
  %812 = vmatpush1.msra.mxu0 %v686
  %813 = vmatprep.subr.mxu0 0.0
  %814 = vmatpush2.msra.mxu0 0.0
  %815 = vmatprep.subr.mxu0 0.0
  %816 = vmatpush2.msra.mxu0 0.0
  %817 = vmatprep.subr.mxu0 0.0
  %818 = vmatpush2.msra.mxu0 0.0
  %819 = vmatprep.subr.mxu0 0.0
  %820 = vmatpush2.msra.mxu0 0.0
  %821 = vmatprep.subr.mxu0 0.0
  %822 = vmatpush2.msra.mxu0 0.0
  %823 = vmatprep.subr.mxu0 0.0
  %824 = vmatpush2.msra.mxu0 0.0
  %825 = vmatprep.subr.mxu0 0.0
  %826 = vmatpush2.msra.mxu0 0.0
  %827 = vmatprep.subr.mxu0 0.0
  %828 = vmatpush2.msra.mxu0 0.0
  %829 = vmatprep.subr.mxu0 0.0
  %830 = vmatpush2.msra.mxu0 0.0
  %831 = vmatprep.subr.mxu0 0.0
  %832 = vmatpush2.msra.mxu0 0.0
  %833 = vmatprep.subr.mxu0 0.0
  %834 = vmatpush2.msra.mxu0 0.0
  %835 = vmatprep.subr.mxu0 0.0
  %836 = vmatpush2.msra.mxu0 0.0
  %837 = vmatprep.subr.mxu0 0.0
  %838 = vmatpush2.msra.mxu0 0.0
  %839 = vmatprep.subr.mxu0 0.0
  %840 = vmatpush2.msra.mxu0 0.0
  %841 = vmatprep.subr.mxu0 0.0
  %842 = vmatpush2.msra.mxu0 0.0
  %843 = vmatprep.subr.mxu0 0.0
  %844 = vmatpush2.msra.mxu0 0.0
  %845 = vmatprep.mubr.f32.mxu0 0.0
  %846 = vmatmul.mubr.f32.gmra.mxu0 %v779
  %v847 = vpop.f32.mrf.mxu0
  %v848 = vadd.f32 %v775, %v847
  %v849 = vpop.f32.mrf.mxu0
  %850 = vdwg.mxu0
  %v852 = vsel %vm418, %v674, 0
  %854 = vmatprep.subr.mxu0 0.0
  %855 = vmatpush1.msra.mxu0 0.0
  %856 = vmatprep.subr.mxu0 0.0
  %857 = vmatpush1.msra.mxu0 0.0
  %858 = vmatprep.subr.mxu0 0.0
  %859 = vmatpush1.msra.mxu0 0.0
  %860 = vmatprep.subr.mxu0 0.0
  %861 = vmatpush1.msra.mxu0 0.0
  %862 = vmatprep.subr.mxu0 0.0
  %863 = vmatpush1.msra.mxu0 0.0
  %864 = vmatprep.subr.mxu0 0.0
  %865 = vmatpush1.msra.mxu0 0.0
  %866 = vmatprep.subr.mxu0 0.0
  %867 = vmatpush1.msra.mxu0 0.0
  %868 = vmatprep.subr.mxu0 0.0
  %869 = vmatpush1.msra.mxu0 0.0
  %870 = vmatprep.subr.mxu0 0.0
  %871 = vmatpush1.msra.mxu0 0.0
  %872 = vmatprep.subr.mxu0 0.0
  %873 = vmatpush1.msra.mxu0 0.0
  %874 = vmatprep.subr.mxu0 0.0
  %875 = vmatpush1.msra.mxu0 0.0
  %876 = vmatprep.subr.mxu0 0.0
  %877 = vmatpush1.msra.mxu0 0.0
  %878 = vmatprep.subr.mxu0 0.0
  %879 = vmatpush1.msra.mxu0 %v704
  %880 = vmatprep.subr.mxu0 0.0
  %881 = vmatpush1.msra.mxu0 %v702
  %882 = vmatprep.subr.mxu0 0.0
  %883 = vmatpush1.msra.mxu0 %v700
  %884 = vmatprep.subr.mxu0 0.0
  %885 = vmatpush1.msra.mxu0 %v698
  %886 = vmatprep.subr.mxu0 0.0
  %887 = vmatpush2.msra.mxu0 0.0
  %888 = vmatprep.subr.mxu0 0.0
  %889 = vmatpush2.msra.mxu0 0.0
  %890 = vmatprep.subr.mxu0 0.0
  %891 = vmatpush2.msra.mxu0 0.0
  %892 = vmatprep.subr.mxu0 0.0
  %893 = vmatpush2.msra.mxu0 0.0
  %894 = vmatprep.subr.mxu0 0.0
  %895 = vmatpush2.msra.mxu0 0.0
  %896 = vmatprep.subr.mxu0 0.0
  %897 = vmatpush2.msra.mxu0 0.0
  %898 = vmatprep.subr.mxu0 0.0
  %899 = vmatpush2.msra.mxu0 0.0
  %900 = vmatprep.subr.mxu0 0.0
  %901 = vmatpush2.msra.mxu0 0.0
  %902 = vmatprep.subr.mxu0 0.0
  %903 = vmatpush2.msra.mxu0 0.0
  %904 = vmatprep.subr.mxu0 0.0
  %905 = vmatpush2.msra.mxu0 0.0
  %906 = vmatprep.subr.mxu0 0.0
  %907 = vmatpush2.msra.mxu0 0.0
  %908 = vmatprep.subr.mxu0 0.0
  %909 = vmatpush2.msra.mxu0 0.0
  %910 = vmatprep.subr.mxu0 0.0
  %911 = vmatpush2.msra.mxu0 0.0
  %912 = vmatprep.subr.mxu0 0.0
  %913 = vmatpush2.msra.mxu0 0.0
  %914 = vmatprep.subr.mxu0 0.0
  %915 = vmatpush2.msra.mxu0 0.0
  %916 = vmatprep.subr.mxu0 0.0
  %917 = vmatpush2.msra.mxu0 0.0
  %918 = vmatprep.mubr.f32.mxu0 0.0
  %919 = vmatmul.mubr.f32.gmra.mxu0 %v852
  %v920 = vpop.f32.mrf.mxu0
  %v921 = vadd.f32 0.0, %v920
  %v922 = vpop.f32.mrf.mxu0
  %923 = vdwg.mxu0
  %v924 = vadd.f32 %v848, %v921
  %v925 = vld [vmem:[#allocation2] sm:$0x1]
  %v927 = vlaneseq
  %v928 = vshrl.u32 %v927, 7
  %v929 = vsub.s32 0, %v928
  %v930 = vrot.slane %v925, %v929
  %v932 = vadd.f32 %v924, %v930
  %vm933 = vcmask 7168
  %934 = vst.msk [vmem:[%s16] sm:$0xff] %vm933, %v932
  // Predicated region
  $region66: #{tpu_custom_call.1} parent=0 // pred_check
    _
  $region67: #{tpu_custom_call.1} parent=0 // pred_check_branch
    %936 = sbr.rel (0) target = $region69
  $region68: #{tpu_custom_call.1} parent=0 // pred_region
    _
  $region69: #{tpu_custom_call.1} parent=0 // pred_fallthru
    _
  // Predicated region
  $region70: #{tpu_custom_call.1} parent=0 // pred_check
    _
  $region71: #{tpu_custom_call.1} parent=0 // pred_check_branch
    %938 = sbr.rel (0) target = $region73
  $region72: #{tpu_custom_call.1} parent=0 // pred_region
    _
  $region73: #{tpu_custom_call.1} parent=0 // pred_fallthru
    _

</llo_original>
